<compile_context>
chip_gen: v6e
topology: v6e:2x2x1
jax: 0.10.0
libtpu: 0.0.40
codegen_flags: <defaults>
</compile_context>

<pallas_src>
import functools

import jax
import jax.numpy as jnp
from jax.experimental import pallas as pl
from jax.experimental.pallas import tpu as pltpu


def _conv_block_kernel(xp_ref, w_ref, bias_ref, lng_ref, lnb_ref, keep_ref,
                       o_ref, *, ln_eps: float):
    """One batch element: conv(+folded BN) -> ReLU -> LayerNorm -> mask.

    xp_ref:   (T + K - 1, C_in)  zero-padded input (time on sublanes)
    w_ref:    (K, C_in, C_out)   conv weights with BN scale folded in
    bias_ref: (1, C_out)         folded conv-bias + BN shift
    lng_ref:  (1, C_out)         LayerNorm gamma
    lnb_ref:  (1, C_out)         LayerNorm beta
    keep_ref: (T, 1)             1.0 = keep, 0.0 = masked_fill(0)
    o_ref:    (T, C_out)
    """
    T, C_out = o_ref.shape
    K = w_ref.shape[0]

    # Conv1d (same padding) as K shifted matmuls on the MXU, f32 accumulate.
    acc = jnp.zeros((T, C_out), jnp.float32)
    for k in range(K):  # K is small and static -> fully unrolled
        acc = acc + jnp.dot(xp_ref[pl.ds(k, T), :], w_ref[k],
                            preferred_element_type=jnp.float32)

    # BatchNorm (folded) -> ReLU. Dropout is identity in eval mode.
    y = jnp.maximum(acc + bias_ref[...], 0.0)

    # LayerNorm over the channel (lane) axis.
    mean = jnp.mean(y, axis=-1, keepdims=True)
    yc = y - mean
    var = jnp.mean(yc * yc, axis=-1, keepdims=True)
    y = yc * jax.lax.rsqrt(var + ln_eps) * lng_ref[...] + lnb_ref[...]

    # masked_fill(mask, 0) as a multiply by the keep mask.
    o_ref[...] = y * keep_ref[...]


def conv_block_forward(x, conv_w, conv_b,
                       bn_gamma, bn_beta, bn_mean, bn_var,
                       ln_gamma, ln_beta,
                       mask=None, bn_eps=1e-5, ln_eps=1e-5):
    """ConvBlock forward.  x: (B, T, C_in) -> (B, T, C_out)."""
    B, T, C_in = x.shape
    C_out, C_in_w, K = conv_w.shape
    assert C_in_w == C_in
    assert K % 2 == 1, "same-padding Conv1d requires an odd kernel size"
    pad = (K - 1) // 2

    # --- trace-time constant folding: BatchNorm (eval) + conv bias ---
    bn_scale = bn_gamma / jnp.sqrt(bn_var + bn_eps)                        # (C_out,)
    w_eff = (jnp.transpose(conv_w, (2, 1, 0))
             * bn_scale[None, None, :]).astype(jnp.float32)                # (K, C_in, C_out)
    bias_eff = ((conv_b - bn_mean) * bn_scale
                + bn_beta).reshape(1, C_out).astype(jnp.float32)

    # Zero-pad time so the kernel only does static shifted slices.
    x_pad = jnp.pad(x.astype(jnp.float32), ((0, 0), (pad, pad), (0, 0)))

    if mask is None:
        keep = jnp.ones((B, T, 1), jnp.float32)
    else:
        keep = (1.0 - mask.astype(jnp.float32)).reshape(B, T, 1)

    ln_g = ln_gamma.reshape(1, C_out).astype(jnp.float32)
    ln_b = ln_beta.reshape(1, C_out).astype(jnp.float32)

    kernel = functools.partial(_conv_block_kernel, ln_eps=float(ln_eps))

    return pl.pallas_call(
        kernel,
        out_shape=jax.ShapeDtypeStruct((B, T, C_out), jnp.float32),
        grid=(B,),
        in_specs=[
            pl.BlockSpec((None, T + K - 1, C_in), lambda b: (b, 0, 0)),    # x_pad
            pl.BlockSpec((K, C_in, C_out), lambda b: (0, 0, 0)),           # w_eff
            pl.BlockSpec((1, C_out), lambda b: (0, 0)),                    # bias_eff
            pl.BlockSpec((1, C_out), lambda b: (0, 0)),                    # ln gamma
            pl.BlockSpec((1, C_out), lambda b: (0, 0)),                    # ln beta
            pl.BlockSpec((None, T, 1), lambda b: (b, 0, 0)),               # keep mask
        ],
        out_specs=pl.BlockSpec((None, T, C_out), lambda b: (b, 0, 0)),
        compiler_params=pltpu.CompilerParams(
            dimension_semantics=("parallel",)),
    )(x_pad, w_eff, bias_eff, ln_g, ln_b, keep)


def _reference(x, conv_w, conv_b, bn_gamma, bn_beta, bn_mean, bn_var,
               ln_gamma, ln_beta, mask=None, bn_eps=1e-5, ln_eps=1e-5):
    """Pure-JAX reference mirroring the PyTorch eval-mode forward."""
    C_out, _, K = conv_w.shape
    pad = (K - 1) // 2
    xt = jnp.transpose(x, (0, 2, 1))                                       # (B, C_in, T)
    y = jax.lax.conv_general_dilated(
        xt, conv_w, window_strides=(1,), padding=[(pad, pad)],
        dimension_numbers=("NCH", "OIH", "NCH"))                           # (B, C_out, T)
    y = y + conv_b[None, :, None]
    y = ((y - bn_mean[None, :, None])
         * (bn_gamma[None, :, None] / jnp.sqrt(bn_var[None, :, None] + bn_eps))
         + bn_beta[None, :, None])
    y = jnp.maximum(y, 0.0)
    y = jnp.transpose(y, (0, 2, 1))                                        # (B, T, C_out)
    mu = jnp.mean(y, axis=-1, keepdims=True)
    var = jnp.mean((y - mu) ** 2, axis=-1, keepdims=True)
    y = (y - mu) / jnp.sqrt(var + ln_eps) * ln_gamma + ln_beta
    if mask is not None:
        y = jnp.where(mask[..., None], 0.0, y)
    return y


if __name__ == "__main__":
    key = jax.random.PRNGKey(0)
    ks = jax.random.split(key, 10)

    B, T, C_in, C_out, K = 2, 16, 8, 32, 9        # batch=2, seq=16, hidden=32

    x = jax.random.normal(ks[0], (B, T, C_in), jnp.float32)
    conv_w = jax.random.normal(ks[1], (C_out, C_in, K), jnp.float32) * (2.0 / (C_in * K)) ** 0.5
    conv_b = jax.random.normal(ks[2], (C_out,), jnp.float32) * 0.1
    bn_gamma = 1.0 + 0.1 * jax.random.normal(ks[3], (C_out,), jnp.float32)
    bn_beta = 0.1 * jax.random.normal(ks[4], (C_out,), jnp.float32)
    bn_mean = 0.1 * jax.random.normal(ks[5], (C_out,), jnp.float32)
    bn_var = 0.5 + jax.random.uniform(ks[6], (C_out,), jnp.float32)
    ln_gamma = 1.0 + 0.1 * jax.random.normal(ks[7], (C_out,), jnp.float32)
    ln_beta = 0.1 * jax.random.normal(ks[8], (C_out,), jnp.float32)

    # Padding mask: last 3 time steps of the second batch element are masked.
    mask = jnp.arange(T)[None, :] >= jnp.array([[T], [T - 3]])             # (B, T) bool

    out = conv_block_forward(x, conv_w, conv_b,
                             bn_gamma, bn_beta, bn_mean, bn_var,
                             ln_gamma, ln_beta, mask=mask)
    out = jax.block_until_ready(out)

    ref = _reference(x, conv_w, conv_b, bn_gamma, bn_beta, bn_mean, bn_var,
                     ln_gamma, ln_beta, mask=mask)

    assert out.shape == (B, T, C_out)
    assert jnp.allclose(out, ref, atol=1e-4, rtol=1e-4), "mismatch vs reference"

    print("KERNEL_OK")
</pallas_src>

<mosaic_0001>
module attributes {stable_mosaic.version = 11 : i64} {
  func.func @_conv_block_kernel(%arg0: i32, %arg1: memref<1x24x8xf32, #tpu.memory_space<vmem>>, %arg2: memref<9x8x32xf32, #tpu.memory_space<vmem>>, %arg3: memref<1x32xf32, #tpu.memory_space<vmem>>, %arg4: memref<1x32xf32, #tpu.memory_space<vmem>>, %arg5: memref<1x32xf32, #tpu.memory_space<vmem>>, %arg6: memref<1x16x1xf32, #tpu.memory_space<vmem>>, %arg7: memref<1x16x32xf32, #tpu.memory_space<vmem>>) attributes {dimension_semantics = [#tpu.dimension_semantics<parallel>], iteration_bounds = array<i64: 2>, scalar_prefetch = 0 : i64, scratch_operands = 0 : i64, tpu.core_type = #tpu.core_type<tc>, window_params = [{transform_indices = @transform_0, window_bounds = array<i64: 1, 24, 8>}, {pipeline_mode = #tpu.pipeline_mode<synchronous>, transform_indices = @transform_1, window_bounds = array<i64: 9, 8, 32>}, {pipeline_mode = #tpu.pipeline_mode<synchronous>, transform_indices = @transform_2, window_bounds = array<i64: 1, 32>}, {pipeline_mode = #tpu.pipeline_mode<synchronous>, transform_indices = @transform_3, window_bounds = array<i64: 1, 32>}, {pipeline_mode = #tpu.pipeline_mode<synchronous>, transform_indices = @transform_4, window_bounds = array<i64: 1, 32>}, {transform_indices = @transform_5, window_bounds = array<i64: 1, 16, 1>}, {transform_indices = @transform_6, window_bounds = array<i64: 1, 16, 32>}]} {
    %cst = arith.constant 0.000000e+00 : f32
    %0 = vector.broadcast %cst : f32 to vector<16x32xf32>
    %c0 = arith.constant 0 : index
    %c0_0 = arith.constant 0 : index
    %c0_1 = arith.constant 0 : index
    %1 = vector.load %arg1[%c0, %c0_0, %c0_1] : memref<1x24x8xf32, #tpu.memory_space<vmem>>, vector<1x16x8xf32>
    %2 = vector.shape_cast %1 : vector<1x16x8xf32> to vector<16x8xf32>
    %c0_2 = arith.constant 0 : index
    %c0_3 = arith.constant 0 : index
    %c0_4 = arith.constant 0 : index
    %3 = vector.load %arg2[%c0_2, %c0_3, %c0_4] : memref<9x8x32xf32, #tpu.memory_space<vmem>>, vector<1x8x32xf32>
    %4 = vector.shape_cast %3 : vector<1x8x32xf32> to vector<8x32xf32>
    %cst_5 = arith.constant dense<0.000000e+00> : vector<16x32xf32>
    %5 = tpu.matmul %2, %4, %cst_5 {dimension_numbers = #tpu.dot_dimension_numbers<[1], [0], [0], [1], [0, 0, 1, 1], [], []>} : vector<16x8xf32>, vector<8x32xf32>, vector<16x32xf32> -> vector<16x32xf32>
    %6 = arith.addf %0, %5 : vector<16x32xf32>
    %c0_6 = arith.constant 0 : index
    %c1 = arith.constant 1 : index
    %c0_7 = arith.constant 0 : index
    %7 = vector.load %arg1[%c0_6, %c1, %c0_7] : memref<1x24x8xf32, #tpu.memory_space<vmem>>, vector<1x16x8xf32>
    %8 = vector.shape_cast %7 : vector<1x16x8xf32> to vector<16x8xf32>
    %c1_8 = arith.constant 1 : index
    %c0_9 = arith.constant 0 : index
    %c0_10 = arith.constant 0 : index
    %9 = vector.load %arg2[%c1_8, %c0_9, %c0_10] : memref<9x8x32xf32, #tpu.memory_space<vmem>>, vector<1x8x32xf32>
    %10 = vector.shape_cast %9 : vector<1x8x32xf32> to vector<8x32xf32>
    %cst_11 = arith.constant dense<0.000000e+00> : vector<16x32xf32>
    %11 = tpu.matmul %8, %10, %cst_11 {dimension_numbers = #tpu.dot_dimension_numbers<[1], [0], [0], [1], [0, 0, 1, 1], [], []>} : vector<16x8xf32>, vector<8x32xf32>, vector<16x32xf32> -> vector<16x32xf32>
    %12 = arith.addf %6, %11 : vector<16x32xf32>
    %c0_12 = arith.constant 0 : index
    %c2 = arith.constant 2 : index
    %c0_13 = arith.constant 0 : index
    %13 = vector.load %arg1[%c0_12, %c2, %c0_13] : memref<1x24x8xf32, #tpu.memory_space<vmem>>, vector<1x16x8xf32>
    %14 = vector.shape_cast %13 : vector<1x16x8xf32> to vector<16x8xf32>
    %c2_14 = arith.constant 2 : index
    %c0_15 = arith.constant 0 : index
    %c0_16 = arith.constant 0 : index
    %15 = vector.load %arg2[%c2_14, %c0_15, %c0_16] : memref<9x8x32xf32, #tpu.memory_space<vmem>>, vector<1x8x32xf32>
    %16 = vector.shape_cast %15 : vector<1x8x32xf32> to vector<8x32xf32>
    %cst_17 = arith.constant dense<0.000000e+00> : vector<16x32xf32>
    %17 = tpu.matmul %14, %16, %cst_17 {dimension_numbers = #tpu.dot_dimension_numbers<[1], [0], [0], [1], [0, 0, 1, 1], [], []>} : vector<16x8xf32>, vector<8x32xf32>, vector<16x32xf32> -> vector<16x32xf32>
    %18 = arith.addf %12, %17 : vector<16x32xf32>
    %c0_18 = arith.constant 0 : index
    %c3 = arith.constant 3 : index
    %c0_19 = arith.constant 0 : index
    %19 = vector.load %arg1[%c0_18, %c3, %c0_19] : memref<1x24x8xf32, #tpu.memory_space<vmem>>, vector<1x16x8xf32>
    %20 = vector.shape_cast %19 : vector<1x16x8xf32> to vector<16x8xf32>
    %c3_20 = arith.constant 3 : index
    %c0_21 = arith.constant 0 : index
    %c0_22 = arith.constant 0 : index
    %21 = vector.load %arg2[%c3_20, %c0_21, %c0_22] : memref<9x8x32xf32, #tpu.memory_space<vmem>>, vector<1x8x32xf32>
    %22 = vector.shape_cast %21 : vector<1x8x32xf32> to vector<8x32xf32>
    %cst_23 = arith.constant dense<0.000000e+00> : vector<16x32xf32>
    %23 = tpu.matmul %20, %22, %cst_23 {dimension_numbers = #tpu.dot_dimension_numbers<[1], [0], [0], [1], [0, 0, 1, 1], [], []>} : vector<16x8xf32>, vector<8x32xf32>, vector<16x32xf32> -> vector<16x32xf32>
    %24 = arith.addf %18, %23 : vector<16x32xf32>
    %c0_24 = arith.constant 0 : index
    %c4 = arith.constant 4 : index
    %c0_25 = arith.constant 0 : index
    %25 = vector.load %arg1[%c0_24, %c4, %c0_25] : memref<1x24x8xf32, #tpu.memory_space<vmem>>, vector<1x16x8xf32>
    %26 = vector.shape_cast %25 : vector<1x16x8xf32> to vector<16x8xf32>
    %c4_26 = arith.constant 4 : index
    %c0_27 = arith.constant 0 : index
    %c0_28 = arith.constant 0 : index
    %27 = vector.load %arg2[%c4_26, %c0_27, %c0_28] : memref<9x8x32xf32, #tpu.memory_space<vmem>>, vector<1x8x32xf32>
    %28 = vector.shape_cast %27 : vector<1x8x32xf32> to vector<8x32xf32>
    %cst_29 = arith.constant dense<0.000000e+00> : vector<16x32xf32>
    %29 = tpu.matmul %26, %28, %cst_29 {dimension_numbers = #tpu.dot_dimension_numbers<[1], [0], [0], [1], [0, 0, 1, 1], [], []>} : vector<16x8xf32>, vector<8x32xf32>, vector<16x32xf32> -> vector<16x32xf32>
    %30 = arith.addf %24, %29 : vector<16x32xf32>
    %c0_30 = arith.constant 0 : index
    %c5 = arith.constant 5 : index
    %c0_31 = arith.constant 0 : index
    %31 = vector.load %arg1[%c0_30, %c5, %c0_31] : memref<1x24x8xf32, #tpu.memory_space<vmem>>, vector<1x16x8xf32>
    %32 = vector.shape_cast %31 : vector<1x16x8xf32> to vector<16x8xf32>
    %c5_32 = arith.constant 5 : index
    %c0_33 = arith.constant 0 : index
    %c0_34 = arith.constant 0 : index
    %33 = vector.load %arg2[%c5_32, %c0_33, %c0_34] : memref<9x8x32xf32, #tpu.memory_space<vmem>>, vector<1x8x32xf32>
    %34 = vector.shape_cast %33 : vector<1x8x32xf32> to vector<8x32xf32>
    %cst_35 = arith.constant dense<0.000000e+00> : vector<16x32xf32>
    %35 = tpu.matmul %32, %34, %cst_35 {dimension_numbers = #tpu.dot_dimension_numbers<[1], [0], [0], [1], [0, 0, 1, 1], [], []>} : vector<16x8xf32>, vector<8x32xf32>, vector<16x32xf32> -> vector<16x32xf32>
    %36 = arith.addf %30, %35 : vector<16x32xf32>
    %c0_36 = arith.constant 0 : index
    %c6 = arith.constant 6 : index
    %c0_37 = arith.constant 0 : index
    %37 = vector.load %arg1[%c0_36, %c6, %c0_37] : memref<1x24x8xf32, #tpu.memory_space<vmem>>, vector<1x16x8xf32>
    %38 = vector.shape_cast %37 : vector<1x16x8xf32> to vector<16x8xf32>
    %c6_38 = arith.constant 6 : index
    %c0_39 = arith.constant 0 : index
    %c0_40 = arith.constant 0 : index
    %39 = vector.load %arg2[%c6_38, %c0_39, %c0_40] : memref<9x8x32xf32, #tpu.memory_space<vmem>>, vector<1x8x32xf32>
    %40 = vector.shape_cast %39 : vector<1x8x32xf32> to vector<8x32xf32>
    %cst_41 = arith.constant dense<0.000000e+00> : vector<16x32xf32>
    %41 = tpu.matmul %38, %40, %cst_41 {dimension_numbers = #tpu.dot_dimension_numbers<[1], [0], [0], [1], [0, 0, 1, 1], [], []>} : vector<16x8xf32>, vector<8x32xf32>, vector<16x32xf32> -> vector<16x32xf32>
    %42 = arith.addf %36, %41 : vector<16x32xf32>
    %c0_42 = arith.constant 0 : index
    %c7 = arith.constant 7 : index
    %c0_43 = arith.constant 0 : index
    %43 = vector.load %arg1[%c0_42, %c7, %c0_43] : memref<1x24x8xf32, #tpu.memory_space<vmem>>, vector<1x16x8xf32>
    %44 = vector.shape_cast %43 : vector<1x16x8xf32> to vector<16x8xf32>
    %c7_44 = arith.constant 7 : index
    %c0_45 = arith.constant 0 : index
    %c0_46 = arith.constant 0 : index
    %45 = vector.load %arg2[%c7_44, %c0_45, %c0_46] : memref<9x8x32xf32, #tpu.memory_space<vmem>>, vector<1x8x32xf32>
    %46 = vector.shape_cast %45 : vector<1x8x32xf32> to vector<8x32xf32>
    %cst_47 = arith.constant dense<0.000000e+00> : vector<16x32xf32>
    %47 = tpu.matmul %44, %46, %cst_47 {dimension_numbers = #tpu.dot_dimension_numbers<[1], [0], [0], [1], [0, 0, 1, 1], [], []>} : vector<16x8xf32>, vector<8x32xf32>, vector<16x32xf32> -> vector<16x32xf32>
    %48 = arith.addf %42, %47 : vector<16x32xf32>
    %c0_48 = arith.constant 0 : index
    %c8 = arith.constant 8 : index
    %c0_49 = arith.constant 0 : index
    %49 = vector.load %arg1[%c0_48, %c8, %c0_49] : memref<1x24x8xf32, #tpu.memory_space<vmem>>, vector<1x16x8xf32>
    %50 = vector.shape_cast %49 : vector<1x16x8xf32> to vector<16x8xf32>
    %c8_50 = arith.constant 8 : index
    %c0_51 = arith.constant 0 : index
    %c0_52 = arith.constant 0 : index
    %51 = vector.load %arg2[%c8_50, %c0_51, %c0_52] : memref<9x8x32xf32, #tpu.memory_space<vmem>>, vector<1x8x32xf32>
    %52 = vector.shape_cast %51 : vector<1x8x32xf32> to vector<8x32xf32>
    %cst_53 = arith.constant dense<0.000000e+00> : vector<16x32xf32>
    %53 = tpu.matmul %50, %52, %cst_53 {dimension_numbers = #tpu.dot_dimension_numbers<[1], [0], [0], [1], [0, 0, 1, 1], [], []>} : vector<16x8xf32>, vector<8x32xf32>, vector<16x32xf32> -> vector<16x32xf32>
    %54 = arith.addf %48, %53 : vector<16x32xf32>
    %c0_54 = arith.constant 0 : index
    %c0_55 = arith.constant 0 : index
    %55 = vector.load %arg3[%c0_54, %c0_55] : memref<1x32xf32, #tpu.memory_space<vmem>>, vector<1x32xf32>
    %56 = vector.broadcast %55 : vector<1x32xf32> to vector<16x32xf32>
    %57 = arith.addf %54, %56 : vector<16x32xf32>
    %cst_56 = arith.constant 0.000000e+00 : f32
    %58 = vector.broadcast %cst_56 : f32 to vector<16x32xf32>
    %59 = arith.maximumf %57, %58 : vector<16x32xf32>
    %cst_57 = arith.constant dense<0.000000e+00> : vector<16xf32>
    %60 = vector.multi_reduction <add>, %59, %cst_57 [1] : vector<16x32xf32> to vector<16xf32>
    %61 = vector.shape_cast %60 : vector<16xf32> to vector<16x1xf32>
    %cst_58 = arith.constant 3.200000e+01 : f32
    %62 = vector.broadcast %cst_58 : f32 to vector<16x1xf32>
    %63 = arith.divf %61, %62 : vector<16x1xf32>
    %64 = vector.broadcast %63 : vector<16x1xf32> to vector<16x32xf32>
    %65 = arith.subf %59, %64 : vector<16x32xf32>
    %66 = arith.mulf %65, %65 : vector<16x32xf32>
    %cst_59 = arith.constant dense<0.000000e+00> : vector<16xf32>
    %67 = vector.multi_reduction <add>, %66, %cst_59 [1] : vector<16x32xf32> to vector<16xf32>
    %68 = vector.shape_cast %67 : vector<16xf32> to vector<16x1xf32>
    %cst_60 = arith.constant 3.200000e+01 : f32
    %69 = vector.broadcast %cst_60 : f32 to vector<16x1xf32>
    %70 = arith.divf %68, %69 : vector<16x1xf32>
    %cst_61 = arith.constant 9.99999974E-6 : f32
    %71 = vector.broadcast %cst_61 : f32 to vector<16x1xf32>
    %72 = arith.addf %70, %71 : vector<16x1xf32>
    %73 = math.rsqrt %72 : vector<16x1xf32>
    %74 = vector.broadcast %73 : vector<16x1xf32> to vector<16x32xf32>
    %75 = arith.mulf %65, %74 : vector<16x32xf32>
    %c0_62 = arith.constant 0 : index
    %c0_63 = arith.constant 0 : index
    %76 = vector.load %arg4[%c0_62, %c0_63] : memref<1x32xf32, #tpu.memory_space<vmem>>, vector<1x32xf32>
    %77 = vector.broadcast %76 : vector<1x32xf32> to vector<16x32xf32>
    %78 = arith.mulf %75, %77 : vector<16x32xf32>
    %c0_64 = arith.constant 0 : index
    %c0_65 = arith.constant 0 : index
    %79 = vector.load %arg5[%c0_64, %c0_65] : memref<1x32xf32, #tpu.memory_space<vmem>>, vector<1x32xf32>
    %80 = vector.broadcast %79 : vector<1x32xf32> to vector<16x32xf32>
    %81 = arith.addf %78, %80 : vector<16x32xf32>
    %c0_66 = arith.constant 0 : index
    %c0_67 = arith.constant 0 : index
    %c0_68 = arith.constant 0 : index
    %82 = vector.load %arg6[%c0_66, %c0_67, %c0_68] : memref<1x16x1xf32, #tpu.memory_space<vmem>>, vector<1x16x1xf32>
    %83 = vector.shape_cast %82 : vector<1x16x1xf32> to vector<16x1xf32>
    %84 = vector.broadcast %83 : vector<16x1xf32> to vector<16x32xf32>
    %85 = arith.mulf %81, %84 : vector<16x32xf32>
    %c0_69 = arith.constant 0 : index
    %c0_70 = arith.constant 0 : index
    %c0_71 = arith.constant 0 : index
    %86 = vector.load %arg7[%c0_69, %c0_70, %c0_71] : memref<1x16x32xf32, #tpu.memory_space<vmem>>, vector<1x16x32xf32>
    %87 = vector.shape_cast %86 : vector<1x16x32xf32> to vector<16x32xf32>
    %88 = vector.shape_cast %85 : vector<16x32xf32> to vector<1x16x32xf32>
    tpu.vector_store %arg7[%c0_69, %c0_70, %c0_71], %88 {strides = array<i32>} : memref<1x16x32xf32, #tpu.memory_space<vmem>>, vector<1x16x32xf32>,
    return
  }
  func.func @transform_0(%arg0: i32) -> (i32, i32, i32) {
    %c0_i32 = arith.constant 0 : i32
    %c0_i32_0 = arith.constant 0 : i32
    %c0_i32_1 = arith.constant 0 : i32
    return %arg0, %c0_i32, %c0_i32_0 : i32, i32, i32
  }
  func.func @transform_1(%arg0: i32) -> (i32, i32, i32) {
    %c0_i32 = arith.constant 0 : i32
    %c0_i32_0 = arith.constant 0 : i32
    %c0_i32_1 = arith.constant 0 : i32
    %c0_i32_2 = arith.constant 0 : i32
    return %c0_i32, %c0_i32_0, %c0_i32_1 : i32, i32, i32
  }
  func.func @transform_2(%arg0: i32) -> (i32, i32) {
    %c0_i32 = arith.constant 0 : i32
    %c0_i32_0 = arith.constant 0 : i32
    %c0_i32_1 = arith.constant 0 : i32
    return %c0_i32, %c0_i32_0 : i32, i32
  }
  func.func @transform_3(%arg0: i32) -> (i32, i32) {
    %c0_i32 = arith.constant 0 : i32
    %c0_i32_0 = arith.constant 0 : i32
    %c0_i32_1 = arith.constant 0 : i32
    return %c0_i32, %c0_i32_0 : i32, i32
  }
  func.func @transform_4(%arg0: i32) -> (i32, i32) {
    %c0_i32 = arith.constant 0 : i32
    %c0_i32_0 = arith.constant 0 : i32
    %c0_i32_1 = arith.constant 0 : i32
    return %c0_i32, %c0_i32_0 : i32, i32
  }
  func.func @transform_5(%arg0: i32) -> (i32, i32, i32) {
    %c0_i32 = arith.constant 0 : i32
    %c0_i32_0 = arith.constant 0 : i32
    %c0_i32_1 = arith.constant 0 : i32
    return %arg0, %c0_i32, %c0_i32_0 : i32, i32, i32
  }
  func.func @transform_6(%arg0: i32) -> (i32, i32, i32) {
    %c0_i32 = arith.constant 0 : i32
    %c0_i32_0 = arith.constant 0 : i32
    %c0_i32_1 = arith.constant 0 : i32
    return %arg0, %c0_i32, %c0_i32_0 : i32, i32, i32
  }
}

</mosaic_0001>

<llo_original>
// kernel: tpu_custom_call.1
$region0: #{tpu_custom_call.1}
  #allocation0 [shape = 'u32[]', space=smem, size = 0x4, offset = 0x4, fixed_abs, tag = 'smem constant byte address 0x4 - core index']
  #allocation1 [shape = 'u32[144,128]{1,0:T(1,128)}', space=vmem, size = 0x12000, scoped, tag = 'internal scratch']
  %s0 = inlined_call_operand.vmem [shape: f32[2,24,8], index: 0, kind: input, shape index: {}]
  %s1 = inlined_call_operand.vmem [shape: f32[9,8,32], index: 1, kind: input, shape index: {}]
  %s2 = inlined_call_operand.vmem [shape: f32[1,32], index: 2, kind: input, shape index: {}]
  %s3 = inlined_call_operand.vmem [shape: f32[1,32], index: 3, kind: input, shape index: {}]
  %s4 = inlined_call_operand.vmem [shape: f32[1,32], index: 4, kind: input, shape index: {}]
  %s5 = inlined_call_operand.vmem [shape: f32[2,16,1], index: 5, kind: input, shape index: {}]
  %s6 = inlined_call_operand.hbm [shape: f32[2,16,32], index: 6, kind: output, shape index: {}]
  %s7 = sld [smem:[#allocation0]]
  $region57: #{tpu_custom_call.1} parent=0
    _
  %s9 = ssub.s32 1, %s7
  %s10 = scalar_select 0, %s9, %s7
  $region1: #{tpu_custom_call.1} parent=0
    #allocation2 [shape = 'u8[16384]{0}', space=vmem, size = 0x4000, scoped, tag = 'output window, operand 0']
    #allocation3 [shape = 's32[2]{0}', space=sflag, size = 0x8, scoped, tag = 'scoped memory for tpu_custom_call.1']
    %11 = vsyncpa [#allocation3], 0
    %s12 = scalar_lea.sflag [#allocation3], 1
    %13 = vsyncpa %s12, 0
    loop: start=0, step=1, limit=4
    $region2: #{tpu_custom_call.1} parent=1 // loop_pre_header
      _
    $region3: #{tpu_custom_call.1} parent=1 // loop_header
      %s15 = sphi 0, %s19
      %p16 = scmp.ge.s32.totalorder %s15, 4
      %s25 = sphi 0, %s27
      %s28 = sphi 0, %s25
      %s29 = sphi 0, %s28
      %s45 = sphi 0, %s29
      %s49 = sphi 0, %s49
      %s51 = sphi 0, %s49
      %s52 = sphi 0, %s51
      %s66 = sphi 0, %s52
      %s70 = sphi 0, %s70
      %s72 = sphi 0, %s70
      %s73 = sphi 0, %s72
      %s87 = sphi 0, %s73
      %s91 = sphi 0, %s91
      %s93 = sphi 0, %s91
      %s94 = sphi 0, %s93
      %s108 = sphi 0, %s94
      %s112 = sphi 0, %s112
      %s114 = sphi 0, %s112
      %s115 = sphi 0, %s114
      %s129 = sphi 0, %s115
      %s135 = sphi 0, %s137
      %s138 = sphi 0, %s135
      %s139 = sphi 0, %s138
      %s155 = sphi 0, %s139
      %s161 = sphi 0, %s163
      %s164 = sphi 0, %s161
      %s165 = sphi 0, %s164
      %s181 = sphi 0, %s165
    $region4: #{tpu_custom_call.1} parent=1 // loop_header_branch
      %18 = sbr.rel (%p16) target = $region8
    $region5: #{tpu_custom_call.1} parent=1 // loop_body
      %s20 = ssub.s32 %s15, 1
      %s21 = ssub.s32 %s15, 2
      %s22 = sadd.s32 %s15, 1
      %s23 = ssub.s32 %s15, %s22
      %p24 = scmp.eq.s32.totalorder %s23, 0
      %s26 = sadd.s32 %s25, 1
      %s27 = scalar_select %p24, %s25, %s26
      %p30 = pneg %p24
      %p31 = scmp.eq.s32.totalorder %s15, 1
      %p32 = por %p30, %p31
      %p33 = scmp.ne.s32.totalorder %s25, %s28
      %p34 = scmp.eq.s32.totalorder %s15, 0
      %p35 = por %p33, %p34
      %p36 = scmp.ne.s32.totalorder %s25, %s28
      %p37 = scmp.eq.s32.totalorder %s20, 1
      %p38 = por %p36, %p37
      %p39 = scmp.ne.s32.totalorder %s28, %s29
      %p40 = scmp.eq.s32.totalorder %s20, 0
      %p41 = por %p39, %p40
      %p42 = scmp.ne.s32.totalorder %s28, %s29
      %p43 = scmp.eq.s32.totalorder %s21, 1
      %p44 = por %p42, %p43
      %p46 = scmp.ne.s32.totalorder %s29, %s45
      %p47 = scmp.eq.s32.totalorder %s21, 0
      %p48 = por %p46, %p47
      %s50 = sadd.s32 %s49, 1
      %p53 = scmp.eq.s32.totalorder %s15, 1
      %p54 = scmp.ne.s32.totalorder %s49, %s51
      %p55 = scmp.eq.s32.totalorder %s15, 0
      %p56 = por %p54, %p55
      %p57 = scmp.ne.s32.totalorder %s49, %s51
      %p58 = scmp.eq.s32.totalorder %s20, 1
      %p59 = por %p57, %p58
      %p60 = scmp.ne.s32.totalorder %s51, %s52
      %p61 = scmp.eq.s32.totalorder %s20, 0
      %p62 = por %p60, %p61
      %p63 = scmp.ne.s32.totalorder %s51, %s52
      %p64 = scmp.eq.s32.totalorder %s21, 1
      %p65 = por %p63, %p64
      %p67 = scmp.ne.s32.totalorder %s52, %s66
      %p68 = scmp.eq.s32.totalorder %s21, 0
      %p69 = por %p67, %p68
      %s71 = sadd.s32 %s70, 1
      %p74 = scmp.eq.s32.totalorder %s15, 1
      %p75 = scmp.ne.s32.totalorder %s70, %s72
      %p76 = scmp.eq.s32.totalorder %s15, 0
      %p77 = por %p75, %p76
      %p78 = scmp.ne.s32.totalorder %s70, %s72
      %p79 = scmp.eq.s32.totalorder %s20, 1
      %p80 = por %p78, %p79
      %p81 = scmp.ne.s32.totalorder %s72, %s73
      %p82 = scmp.eq.s32.totalorder %s20, 0
      %p83 = por %p81, %p82
      %p84 = scmp.ne.s32.totalorder %s72, %s73
      %p85 = scmp.eq.s32.totalorder %s21, 1
      %p86 = por %p84, %p85
      %p88 = scmp.ne.s32.totalorder %s73, %s87
      %p89 = scmp.eq.s32.totalorder %s21, 0
      %p90 = por %p88, %p89
      %s92 = sadd.s32 %s91, 1
      %p95 = scmp.eq.s32.totalorder %s15, 1
      %p96 = scmp.ne.s32.totalorder %s91, %s93
      %p97 = scmp.eq.s32.totalorder %s15, 0
      %p98 = por %p96, %p97
      %p99 = scmp.ne.s32.totalorder %s91, %s93
      %p100 = scmp.eq.s32.totalorder %s20, 1
      %p101 = por %p99, %p100
      %p102 = scmp.ne.s32.totalorder %s93, %s94
      %p103 = scmp.eq.s32.totalorder %s20, 0
      %p104 = por %p102, %p103
      %p105 = scmp.ne.s32.totalorder %s93, %s94
      %p106 = scmp.eq.s32.totalorder %s21, 1
      %p107 = por %p105, %p106
      %p109 = scmp.ne.s32.totalorder %s94, %s108
      %p110 = scmp.eq.s32.totalorder %s21, 0
      %p111 = por %p109, %p110
      %s113 = sadd.s32 %s112, 1
      %p116 = scmp.eq.s32.totalorder %s15, 1
      %p117 = scmp.ne.s32.totalorder %s112, %s114
      %p118 = scmp.eq.s32.totalorder %s15, 0
      %p119 = por %p117, %p118
      %p120 = scmp.ne.s32.totalorder %s112, %s114
      %p121 = scmp.eq.s32.totalorder %s20, 1
      %p122 = por %p120, %p121
      %p123 = scmp.ne.s32.totalorder %s114, %s115
      %p124 = scmp.eq.s32.totalorder %s20, 0
      %p125 = por %p123, %p124
      %p126 = scmp.ne.s32.totalorder %s114, %s115
      %p127 = scmp.eq.s32.totalorder %s21, 1
      %p128 = por %p126, %p127
      %p130 = scmp.ne.s32.totalorder %s115, %s129
      %p131 = scmp.eq.s32.totalorder %s21, 0
      %p132 = por %p130, %p131
      %s133 = ssub.s32 %s15, %s22
      %p134 = scmp.eq.s32.totalorder %s133, 0
      %s136 = sadd.s32 %s135, 1
      %s137 = scalar_select %p134, %s135, %s136
      %p140 = pneg %p134
      %p141 = scmp.eq.s32.totalorder %s15, 1
      %p142 = por %p140, %p141
      %p143 = scmp.ne.s32.totalorder %s135, %s138
      %p144 = scmp.eq.s32.totalorder %s15, 0
      %p145 = por %p143, %p144
      %p146 = scmp.ne.s32.totalorder %s135, %s138
      %p147 = scmp.eq.s32.totalorder %s20, 1
      %p148 = por %p146, %p147
      %p149 = scmp.ne.s32.totalorder %s138, %s139
      %p150 = scmp.eq.s32.totalorder %s20, 0
      %p151 = por %p149, %p150
      %p152 = scmp.ne.s32.totalorder %s138, %s139
      %p153 = scmp.eq.s32.totalorder %s21, 1
      %p154 = por %p152, %p153
      %p156 = scmp.ne.s32.totalorder %s139, %s155
      %p157 = scmp.eq.s32.totalorder %s21, 0
      %p158 = por %p156, %p157
      %s159 = ssub.s32 %s15, %s22
      %p160 = scmp.eq.s32.totalorder %s159, 0
      %s162 = sadd.s32 %s161, 1
      %s163 = scalar_select %p160, %s161, %s162
      %p166 = pneg %p160
      %p167 = scmp.eq.s32.totalorder %s15, 1
      %p168 = por %p166, %p167
      %p169 = scmp.ne.s32.totalorder %s161, %s164
      %p170 = scmp.eq.s32.totalorder %s15, 0
      %p171 = por %p169, %p170
      %p172 = scmp.ne.s32.totalorder %s161, %s164
      %p173 = scmp.eq.s32.totalorder %s20, 1
      %p174 = por %p172, %p173
      %p175 = scmp.ne.s32.totalorder %s164, %s165
      %p176 = scmp.eq.s32.totalorder %s20, 0
      %p177 = por %p175, %p176
      %p178 = scmp.ne.s32.totalorder %s164, %s165
      %p179 = scmp.eq.s32.totalorder %s21, 1
      %p180 = por %p178, %p179
      %p182 = scmp.ne.s32.totalorder %s165, %s181
      %p183 = scmp.eq.s32.totalorder %s21, 0
      %p184 = por %p182, %p183
      %p185 = scmp.le.s32.totalorder 1, %s15
      %p186 = scmp.lt.s32.totalorder %s15, 3
      %p187 = pnand %p185, %p186
      %p188 = pneg %p187
      // Predicated region
      $region9: #{tpu_custom_call.1} parent=5 // pred_check
        _
      $region10: #{tpu_custom_call.1} parent=5 // pred_check_branch
        %190 = sbr.rel (%p187) target = $region12
      $region11: #{tpu_custom_call.1} parent=5 // pred_region
        %s191 = ssub.s32 %s15, 1
        // Predicated region
        $region13: #{tpu_custom_call.1} parent=11 // pred_check
          %p192 = pneg %p62
        $region14: #{tpu_custom_call.1} parent=11 // pred_check_branch
          %194 = sbr.rel (%p192) target = $region16
        $region15: #{tpu_custom_call.1} parent=11 // pred_region
          _
        $region16: #{tpu_custom_call.1} parent=11 // pred_fallthru
          _
        // Predicated region
        $region17: #{tpu_custom_call.1} parent=11 // pred_check
          %p195 = pneg %p83
        $region18: #{tpu_custom_call.1} parent=11 // pred_check_branch
          %197 = sbr.rel (%p195) target = $region20
        $region19: #{tpu_custom_call.1} parent=11 // pred_region
          _
        $region20: #{tpu_custom_call.1} parent=11 // pred_fallthru
          _
        // Predicated region
        $region21: #{tpu_custom_call.1} parent=11 // pred_check
          %p198 = pneg %p104
        $region22: #{tpu_custom_call.1} parent=11 // pred_check_branch
          %200 = sbr.rel (%p198) target = $region24
        $region23: #{tpu_custom_call.1} parent=11 // pred_region
          _
        $region24: #{tpu_custom_call.1} parent=11 // pred_fallthru
          _
        // Predicated region
        $region25: #{tpu_custom_call.1} parent=11 // pred_check
          %p201 = pneg %p125
        $region26: #{tpu_custom_call.1} parent=11 // pred_check_branch
          %203 = sbr.rel (%p201) target = $region28
        $region27: #{tpu_custom_call.1} parent=11 // pred_region
          _
        $region28: #{tpu_custom_call.1} parent=11 // pred_fallthru
          _
      $region12: #{tpu_custom_call.1} parent=5 // pred_fallthru
        _
      %p204 = scmp.lt.s32.totalorder %s15, 2
      // Predicated region
      $region29: #{tpu_custom_call.1} parent=5 // pred_check
        %p205 = pneg %p204
      $region30: #{tpu_custom_call.1} parent=5 // pred_check_branch
        %207 = sbr.rel (%p205) target = $region32
      $region31: #{tpu_custom_call.1} parent=5 // pred_region
        // Predicated region
        $region33: #{tpu_custom_call.1} parent=31 // pred_check
          %p208 = pneg %p35
        $region34: #{tpu_custom_call.1} parent=31 // pred_check_branch
          %210 = sbr.rel (%p208) target = $region36
        $region35: #{tpu_custom_call.1} parent=31 // pred_region
          %p211 = scmp.lt.s32.totalorder %s15, 1
          %s212 = scalar_select %p211, %s15, 1
          %s213 = smul.addr %s212, 3
          %s214 = smul.addr %s213, 8
          %s215 = scalar_lea.vmem %s0, %s214
        $region36: #{tpu_custom_call.1} parent=31 // pred_fallthru
          _
        // Predicated region
        $region37: #{tpu_custom_call.1} parent=31 // pred_check
          %p216 = pneg %p145
        $region38: #{tpu_custom_call.1} parent=31 // pred_check_branch
          %218 = sbr.rel (%p216) target = $region40
        $region39: #{tpu_custom_call.1} parent=31 // pred_region
          %p219 = scmp.lt.s32.totalorder %s15, 1
          %s220 = scalar_select %p219, %s15, 1
          %s221 = smul.addr %s220, 2
          %s222 = smul.addr %s221, 8
          %s223 = scalar_lea.vmem %s5, %s222
        $region40: #{tpu_custom_call.1} parent=31 // pred_fallthru
          _
      $region32: #{tpu_custom_call.1} parent=5 // pred_fallthru
        _
      %p224 = scmp.le.s32.totalorder 1, %s15
      %p225 = scmp.lt.s32.totalorder %s15, 3
      %p226 = pnand %p224, %p225
      %p227 = pneg %p226
      // Predicated region
      $region41: #{tpu_custom_call.1} parent=5 // pred_check
        _
      $region42: #{tpu_custom_call.1} parent=5 // pred_check_branch
        %229 = sbr.rel (%p226) target = $region44
      $region43: #{tpu_custom_call.1} parent=5 // pred_region
        %s230 = ssub.s32 %s15, 1
        %p231 = scmp.lt.s32.totalorder %s20, 1
        %s232 = scalar_select %p231, %s20, 1
        %s233 = smul.addr %s232, 3
        %s234 = smul.addr %s233, 8
        %s235 = scalar_lea.vmem %s0, %s234
        %p236 = pneg %p41
        %p237 = pneg %p38
        %p238 = pneg %p62
        %p239 = pneg %p59
        %p240 = pneg %p83
        %p241 = pneg %p80
        %p242 = pneg %p104
        %p243 = pneg %p101
        %p244 = pneg %p125
        %p245 = pneg %p122
        %p246 = scmp.lt.s32.totalorder %s20, 1
        %s247 = scalar_select %p246, %s20, 1
        %s248 = smul.addr %s247, 2
        %s249 = smul.addr %s248, 8
        %s250 = scalar_lea.vmem %s5, %s249
        %p251 = pneg %p151
        %p252 = pneg %p148
        %p253 = pneg %p177
        %p254 = pneg %p174
        %s255 = sand.u32 %s164, 1
        %s256 = scalar_lea.sflag [#allocation3], %s255
        %s257 = sand.u32 %s164, 1
        %s258 = smul.addr %s257, 16
        %s259 = scalar_lea.vmem [#allocation2], %s258
        %p260 = scmp.lt.s32.totalorder %s20, 1
        %s261 = scalar_select %p260, %s20, 1
        %s262 = smul.addr %s261, 3
        %s263 = smul.addr %s262, 8
        %s264 = scalar_lea.vmem %s0, %s263
        %p265 = scmp.lt.s32.totalorder %s20, 1
        %s266 = scalar_select %p265, %s20, 1
        %s267 = smul.addr %s266, 2
        %s268 = smul.addr %s267, 8
        %s269 = scalar_lea.vmem %s5, %s268
        %v270 = vld [vmem:[%s264] sm:$0xff]
        %v271 = vld [vmem:[%s264 + $0x8] sm:$0xff]
        %v272 = vld [vmem:[%s1] sm:$0xff]
        %v273 = vld [vmem:[%s264 + $0x1] sm:$0xff]
        %v274 = vld [vmem:[%s264 + $0x9] sm:$0xff]
        %s275 = scalar_lea.vmem %s1, 8
        %v276 = vld [vmem:[%s275] sm:$0xff]
        %vm277 = vcmask 64512
        %v279 = vsel %vm277, %v273, 0
        %v282 = vsel %vm277, %v274, 0
        %284 = vmatprep.subr.mxu0 0.0
        %285 = vmatpush1.msra.mxu0 0.0
        %286 = vmatprep.subr.mxu0 0.0
        %287 = vmatpush1.msra.mxu0 0.0
        %288 = vmatprep.subr.mxu0 0.0
        %289 = vmatpush1.msra.mxu0 0.0
        %290 = vmatprep.subr.mxu0 0.0
        %291 = vmatpush1.msra.mxu0 0.0
        %292 = vmatprep.subr.mxu0 0.0
        %293 = vmatpush1.msra.mxu0 0.0
        %294 = vmatprep.subr.mxu0 0.0
        %295 = vmatpush1.msra.mxu0 0.0
        %296 = vmatprep.subr.mxu0 0.0
        %297 = vmatpush1.msra.mxu0 0.0
        %298 = vmatprep.subr.mxu0 0.0
        %299 = vmatpush1.msra.mxu0 0.0
        %300 = vmatprep.subr.mxu0 0.0
        %301 = vmatpush1.msra.mxu0 0.0
        %302 = vmatprep.subr.mxu0 0.0
        %303 = vmatpush1.msra.mxu0 0.0
        %304 = vmatprep.subr.mxu0 0.0
        %305 = vmatpush1.msra.mxu0 0.0
        %306 = vmatprep.subr.mxu0 0.0
        %307 = vmatpush1.msra.mxu0 0.0
        %308 = vmatprep.subr.mxu0 0.0
        %309 = vmatpush1.msra.mxu0 0.0
        %310 = vmatprep.subr.mxu0 0.0
        %311 = vmatpush1.msra.mxu0 0.0
        %312 = vmatprep.subr.mxu0 0.0
        %313 = vmatpush1.msra.mxu0 0.0
        %314 = vmatprep.subr.mxu0 0.0
        %315 = vmatpush1.msra.mxu0 %v276
        %316 = vmatprep.subr.mxu0 0.0
        %317 = vmatpush2.msra.mxu0 0.0
        %318 = vmatprep.subr.mxu0 0.0
        %319 = vmatpush2.msra.mxu0 0.0
        %320 = vmatprep.subr.mxu0 0.0
        %321 = vmatpush2.msra.mxu0 0.0
        %322 = vmatprep.subr.mxu0 0.0
        %323 = vmatpush2.msra.mxu0 0.0
        %324 = vmatprep.subr.mxu0 0.0
        %325 = vmatpush2.msra.mxu0 0.0
        %326 = vmatprep.subr.mxu0 0.0
        %327 = vmatpush2.msra.mxu0 0.0
        %328 = vmatprep.subr.mxu0 0.0
        %329 = vmatpush2.msra.mxu0 0.0
        %330 = vmatprep.subr.mxu0 0.0
        %331 = vmatpush2.msra.mxu0 0.0
        %332 = vmatprep.subr.mxu0 0.0
        %333 = vmatpush2.msra.mxu0 0.0
        %334 = vmatprep.subr.mxu0 0.0
        %335 = vmatpush2.msra.mxu0 0.0
        %336 = vmatprep.subr.mxu0 0.0
        %337 = vmatpush2.msra.mxu0 0.0
        %338 = vmatprep.subr.mxu0 0.0
        %339 = vmatpush2.msra.mxu0 0.0
        %340 = vmatprep.subr.mxu0 0.0
        %341 = vmatpush2.msra.mxu0 0.0
        %342 = vmatprep.subr.mxu0 0.0
        %343 = vmatpush2.msra.mxu0 0.0
        %344 = vmatprep.subr.mxu0 0.0
        %345 = vmatpush2.msra.mxu0 0.0
        %346 = vmatprep.subr.mxu0 0.0
        %347 = vmatpush2.msra.mxu0 0.0
        %348 = vmatprep.mubr.f32.mxu0 0.0
        %349 = vmatmul.mubr.f32.gmra.mxu0 %v279
        %v350 = vpop.f32.mrf.mxu0
        %v351 = vadd.f32 0.0, %v350
        %v352 = vpop.f32.mrf.mxu0
        %353 = vmatprep.mubr.f32.mxu0 0.0
        %354 = vmatmul.mubr.f32.gmra.mxu0 %v282
        %v355 = vpop.f32.mrf.mxu0
        %v356 = vadd.f32 0.0, %v355
        %v357 = vpop.f32.mrf.mxu0
        %358 = vdwg.mxu0
        %v360 = vsel %vm277, %v270, 0
        %v363 = vsel %vm277, %v271, 0
        %365 = vmatprep.subr.mxu0 0.0
        %366 = vmatpush1.msra.mxu0 0.0
        %367 = vmatprep.subr.mxu0 0.0
        %368 = vmatpush1.msra.mxu0 0.0
        %369 = vmatprep.subr.mxu0 0.0
        %370 = vmatpush1.msra.mxu0 0.0
        %371 = vmatprep.subr.mxu0 0.0
        %372 = vmatpush1.msra.mxu0 0.0
        %373 = vmatprep.subr.mxu0 0.0
        %374 = vmatpush1.msra.mxu0 0.0
        %375 = vmatprep.subr.mxu0 0.0
        %376 = vmatpush1.msra.mxu0 0.0
        %377 = vmatprep.subr.mxu0 0.0
        %378 = vmatpush1.msra.mxu0 0.0
        %379 = vmatprep.subr.mxu0 0.0
        %380 = vmatpush1.msra.mxu0 0.0
        %381 = vmatprep.subr.mxu0 0.0
        %382 = vmatpush1.msra.mxu0 0.0
        %383 = vmatprep.subr.mxu0 0.0
        %384 = vmatpush1.msra.mxu0 0.0
        %385 = vmatprep.subr.mxu0 0.0
        %386 = vmatpush1.msra.mxu0 0.0
        %387 = vmatprep.subr.mxu0 0.0
        %388 = vmatpush1.msra.mxu0 0.0
        %389 = vmatprep.subr.mxu0 0.0
        %390 = vmatpush1.msra.mxu0 0.0
        %391 = vmatprep.subr.mxu0 0.0
        %392 = vmatpush1.msra.mxu0 0.0
        %393 = vmatprep.subr.mxu0 0.0
        %394 = vmatpush1.msra.mxu0 0.0
        %395 = vmatprep.subr.mxu0 0.0
        %396 = vmatpush1.msra.mxu0 %v272
        %397 = vmatprep.subr.mxu0 0.0
        %398 = vmatpush2.msra.mxu0 0.0
        %399 = vmatprep.subr.mxu0 0.0
        %400 = vmatpush2.msra.mxu0 0.0
        %401 = vmatprep.subr.mxu0 0.0
        %402 = vmatpush2.msra.mxu0 0.0
        %403 = vmatprep.subr.mxu0 0.0
        %404 = vmatpush2.msra.mxu0 0.0
        %405 = vmatprep.subr.mxu0 0.0
        %406 = vmatpush2.msra.mxu0 0.0
        %407 = vmatprep.subr.mxu0 0.0
        %408 = vmatpush2.msra.mxu0 0.0
        %409 = vmatprep.subr.mxu0 0.0
        %410 = vmatpush2.msra.mxu0 0.0
        %411 = vmatprep.subr.mxu0 0.0
        %412 = vmatpush2.msra.mxu0 0.0
        %413 = vmatprep.subr.mxu0 0.0
        %414 = vmatpush2.msra.mxu0 0.0
        %415 = vmatprep.subr.mxu0 0.0
        %416 = vmatpush2.msra.mxu0 0.0
        %417 = vmatprep.subr.mxu0 0.0
        %418 = vmatpush2.msra.mxu0 0.0
        %419 = vmatprep.subr.mxu0 0.0
        %420 = vmatpush2.msra.mxu0 0.0
        %421 = vmatprep.subr.mxu0 0.0
        %422 = vmatpush2.msra.mxu0 0.0
        %423 = vmatprep.subr.mxu0 0.0
        %424 = vmatpush2.msra.mxu0 0.0
        %425 = vmatprep.subr.mxu0 0.0
        %426 = vmatpush2.msra.mxu0 0.0
        %427 = vmatprep.subr.mxu0 0.0
        %428 = vmatpush2.msra.mxu0 0.0
        %429 = vmatprep.mubr.f32.mxu0 0.0
        %430 = vmatmul.mubr.f32.gmra.mxu0 %v360
        %v431 = vpop.f32.mrf.mxu0
        %v432 = vadd.f32 %v351, %v431
        %v433 = vpop.f32.mrf.mxu0
        %434 = vmatprep.mubr.f32.mxu0 0.0
        %435 = vmatmul.mubr.f32.gmra.mxu0 %v363
        %v436 = vpop.f32.mrf.mxu0
        %v437 = vadd.f32 %v356, %v436
        %v438 = vpop.f32.mrf.mxu0
        %439 = vdwg.mxu0
        %v440 = vld [vmem:[%s264 + $0x2] sm:$0xff]
        %v441 = vld [vmem:[%s264 + $0xa] sm:$0xff]
        %s442 = scalar_lea.vmem %s1, 16
        %v443 = vld [vmem:[%s442] sm:$0xff]
        %v445 = vsel %vm277, %v440, 0
        %v448 = vsel %vm277, %v441, 0
        %450 = vmatprep.subr.mxu0 0.0
        %451 = vmatpush1.msra.mxu0 0.0
        %452 = vmatprep.subr.mxu0 0.0
        %453 = vmatpush1.msra.mxu0 0.0
        %454 = vmatprep.subr.mxu0 0.0
        %455 = vmatpush1.msra.mxu0 0.0
        %456 = vmatprep.subr.mxu0 0.0
        %457 = vmatpush1.msra.mxu0 0.0
        %458 = vmatprep.subr.mxu0 0.0
        %459 = vmatpush1.msra.mxu0 0.0
        %460 = vmatprep.subr.mxu0 0.0
        %461 = vmatpush1.msra.mxu0 0.0
        %462 = vmatprep.subr.mxu0 0.0
        %463 = vmatpush1.msra.mxu0 0.0
        %464 = vmatprep.subr.mxu0 0.0
        %465 = vmatpush1.msra.mxu0 0.0
        %466 = vmatprep.subr.mxu0 0.0
        %467 = vmatpush1.msra.mxu0 0.0
        %468 = vmatprep.subr.mxu0 0.0
        %469 = vmatpush1.msra.mxu0 0.0
        %470 = vmatprep.subr.mxu0 0.0
        %471 = vmatpush1.msra.mxu0 0.0
        %472 = vmatprep.subr.mxu0 0.0
        %473 = vmatpush1.msra.mxu0 0.0
        %474 = vmatprep.subr.mxu0 0.0
        %475 = vmatpush1.msra.mxu0 0.0
        %476 = vmatprep.subr.mxu0 0.0
        %477 = vmatpush1.msra.mxu0 0.0
        %478 = vmatprep.subr.mxu0 0.0
        %479 = vmatpush1.msra.mxu0 0.0
        %480 = vmatprep.subr.mxu0 0.0
        %481 = vmatpush1.msra.mxu0 %v443
        %482 = vmatprep.subr.mxu0 0.0
        %483 = vmatpush2.msra.mxu0 0.0
        %484 = vmatprep.subr.mxu0 0.0
        %485 = vmatpush2.msra.mxu0 0.0
        %486 = vmatprep.subr.mxu0 0.0
        %487 = vmatpush2.msra.mxu0 0.0
        %488 = vmatprep.subr.mxu0 0.0
        %489 = vmatpush2.msra.mxu0 0.0
        %490 = vmatprep.subr.mxu0 0.0
        %491 = vmatpush2.msra.mxu0 0.0
        %492 = vmatprep.subr.mxu0 0.0
        %493 = vmatpush2.msra.mxu0 0.0
        %494 = vmatprep.subr.mxu0 0.0
        %495 = vmatpush2.msra.mxu0 0.0
        %496 = vmatprep.subr.mxu0 0.0
        %497 = vmatpush2.msra.mxu0 0.0
        %498 = vmatprep.subr.mxu0 0.0
        %499 = vmatpush2.msra.mxu0 0.0
        %500 = vmatprep.subr.mxu0 0.0
        %501 = vmatpush2.msra.mxu0 0.0
        %502 = vmatprep.subr.mxu0 0.0
        %503 = vmatpush2.msra.mxu0 0.0
        %504 = vmatprep.subr.mxu0 0.0
        %505 = vmatpush2.msra.mxu0 0.0
        %506 = vmatprep.subr.mxu0 0.0
        %507 = vmatpush2.msra.mxu0 0.0
        %508 = vmatprep.subr.mxu0 0.0
        %509 = vmatpush2.msra.mxu0 0.0
        %510 = vmatprep.subr.mxu0 0.0
        %511 = vmatpush2.msra.mxu0 0.0
        %512 = vmatprep.subr.mxu0 0.0
        %513 = vmatpush2.msra.mxu0 0.0
        %514 = vmatprep.mubr.f32.mxu0 0.0
        %515 = vmatmul.mubr.f32.gmra.mxu0 %v445
        %v516 = vpop.f32.mrf.mxu0
        %v517 = vadd.f32 0.0, %v516
        %v518 = vpop.f32.mrf.mxu0
        %519 = vmatprep.mubr.f32.mxu0 0.0
        %520 = vmatmul.mubr.f32.gmra.mxu0 %v448
        %v521 = vpop.f32.mrf.mxu0
        %v522 = vadd.f32 0.0, %v521
        %v523 = vpop.f32.mrf.mxu0
        %524 = vdwg.mxu0
        %v525 = vadd.f32 %v432, %v517
        %v526 = vadd.f32 %v437, %v522
        %v527 = vld [vmem:[%s264 + $0x3] sm:$0xff]
        %v528 = vld [vmem:[%s264 + $0xb] sm:$0xff]
        %s529 = scalar_lea.vmem %s1, 24
        %v530 = vld [vmem:[%s529] sm:$0xff]
        %v532 = vsel %vm277, %v527, 0
        %v535 = vsel %vm277, %v528, 0
        %537 = vmatprep.subr.mxu0 0.0
        %538 = vmatpush1.msra.mxu0 0.0
        %539 = vmatprep.subr.mxu0 0.0
        %540 = vmatpush1.msra.mxu0 0.0
        %541 = vmatprep.subr.mxu0 0.0
        %542 = vmatpush1.msra.mxu0 0.0
        %543 = vmatprep.subr.mxu0 0.0
        %544 = vmatpush1.msra.mxu0 0.0
        %545 = vmatprep.subr.mxu0 0.0
        %546 = vmatpush1.msra.mxu0 0.0
        %547 = vmatprep.subr.mxu0 0.0
        %548 = vmatpush1.msra.mxu0 0.0
        %549 = vmatprep.subr.mxu0 0.0
        %550 = vmatpush1.msra.mxu0 0.0
        %551 = vmatprep.subr.mxu0 0.0
        %552 = vmatpush1.msra.mxu0 0.0
        %553 = vmatprep.subr.mxu0 0.0
        %554 = vmatpush1.msra.mxu0 0.0
        %555 = vmatprep.subr.mxu0 0.0
        %556 = vmatpush1.msra.mxu0 0.0
        %557 = vmatprep.subr.mxu0 0.0
        %558 = vmatpush1.msra.mxu0 0.0
        %559 = vmatprep.subr.mxu0 0.0
        %560 = vmatpush1.msra.mxu0 0.0
        %561 = vmatprep.subr.mxu0 0.0
        %562 = vmatpush1.msra.mxu0 0.0
        %563 = vmatprep.subr.mxu0 0.0
        %564 = vmatpush1.msra.mxu0 0.0
        %565 = vmatprep.subr.mxu0 0.0
        %566 = vmatpush1.msra.mxu0 0.0
        %567 = vmatprep.subr.mxu0 0.0
        %568 = vmatpush1.msra.mxu0 %v530
        %569 = vmatprep.subr.mxu0 0.0
        %570 = vmatpush2.msra.mxu0 0.0
        %571 = vmatprep.subr.mxu0 0.0
        %572 = vmatpush2.msra.mxu0 0.0
        %573 = vmatprep.subr.mxu0 0.0
        %574 = vmatpush2.msra.mxu0 0.0
        %575 = vmatprep.subr.mxu0 0.0
        %576 = vmatpush2.msra.mxu0 0.0
        %577 = vmatprep.subr.mxu0 0.0
        %578 = vmatpush2.msra.mxu0 0.0
        %579 = vmatprep.subr.mxu0 0.0
        %580 = vmatpush2.msra.mxu0 0.0
        %581 = vmatprep.subr.mxu0 0.0
        %582 = vmatpush2.msra.mxu0 0.0
        %583 = vmatprep.subr.mxu0 0.0
        %584 = vmatpush2.msra.mxu0 0.0
        %585 = vmatprep.subr.mxu0 0.0
        %586 = vmatpush2.msra.mxu0 0.0
        %587 = vmatprep.subr.mxu0 0.0
        %588 = vmatpush2.msra.mxu0 0.0
        %589 = vmatprep.subr.mxu0 0.0
        %590 = vmatpush2.msra.mxu0 0.0
        %591 = vmatprep.subr.mxu0 0.0
        %592 = vmatpush2.msra.mxu0 0.0
        %593 = vmatprep.subr.mxu0 0.0
        %594 = vmatpush2.msra.mxu0 0.0
        %595 = vmatprep.subr.mxu0 0.0
        %596 = vmatpush2.msra.mxu0 0.0
        %597 = vmatprep.subr.mxu0 0.0
        %598 = vmatpush2.msra.mxu0 0.0
        %599 = vmatprep.subr.mxu0 0.0
        %600 = vmatpush2.msra.mxu0 0.0
        %601 = vmatprep.mubr.f32.mxu0 0.0
        %602 = vmatmul.mubr.f32.gmra.mxu0 %v532
        %v603 = vpop.f32.mrf.mxu0
        %v604 = vadd.f32 0.0, %v603
        %v605 = vpop.f32.mrf.mxu0
        %606 = vmatprep.mubr.f32.mxu0 0.0
        %607 = vmatmul.mubr.f32.gmra.mxu0 %v535
        %v608 = vpop.f32.mrf.mxu0
        %v609 = vadd.f32 0.0, %v608
        %v610 = vpop.f32.mrf.mxu0
        %611 = vdwg.mxu0
        %v612 = vadd.f32 %v525, %v604
        %v613 = vadd.f32 %v526, %v609
        %v614 = vld [vmem:[%s264 + $0x4] sm:$0xff]
        %v615 = vld [vmem:[%s264 + $0xc] sm:$0xff]
        %s616 = scalar_lea.vmem %s1, 32
        %v617 = vld [vmem:[%s616] sm:$0xff]
        %v619 = vsel %vm277, %v614, 0
        %v622 = vsel %vm277, %v615, 0
        %624 = vmatprep.subr.mxu0 0.0
        %625 = vmatpush1.msra.mxu0 0.0
        %626 = vmatprep.subr.mxu0 0.0
        %627 = vmatpush1.msra.mxu0 0.0
        %628 = vmatprep.subr.mxu0 0.0
        %629 = vmatpush1.msra.mxu0 0.0
        %630 = vmatprep.subr.mxu0 0.0
        %631 = vmatpush1.msra.mxu0 0.0
        %632 = vmatprep.subr.mxu0 0.0
        %633 = vmatpush1.msra.mxu0 0.0
        %634 = vmatprep.subr.mxu0 0.0
        %635 = vmatpush1.msra.mxu0 0.0
        %636 = vmatprep.subr.mxu0 0.0
        %637 = vmatpush1.msra.mxu0 0.0
        %638 = vmatprep.subr.mxu0 0.0
        %639 = vmatpush1.msra.mxu0 0.0
        %640 = vmatprep.subr.mxu0 0.0
        %641 = vmatpush1.msra.mxu0 0.0
        %642 = vmatprep.subr.mxu0 0.0
        %643 = vmatpush1.msra.mxu0 0.0
        %644 = vmatprep.subr.mxu0 0.0
        %645 = vmatpush1.msra.mxu0 0.0
        %646 = vmatprep.subr.mxu0 0.0
        %647 = vmatpush1.msra.mxu0 0.0
        %648 = vmatprep.subr.mxu0 0.0
        %649 = vmatpush1.msra.mxu0 0.0
        %650 = vmatprep.subr.mxu0 0.0
        %651 = vmatpush1.msra.mxu0 0.0
        %652 = vmatprep.subr.mxu0 0.0
        %653 = vmatpush1.msra.mxu0 0.0
        %654 = vmatprep.subr.mxu0 0.0
        %655 = vmatpush1.msra.mxu0 %v617
        %656 = vmatprep.subr.mxu0 0.0
        %657 = vmatpush2.msra.mxu0 0.0
        %658 = vmatprep.subr.mxu0 0.0
        %659 = vmatpush2.msra.mxu0 0.0
        %660 = vmatprep.subr.mxu0 0.0
        %661 = vmatpush2.msra.mxu0 0.0
        %662 = vmatprep.subr.mxu0 0.0
        %663 = vmatpush2.msra.mxu0 0.0
        %664 = vmatprep.subr.mxu0 0.0
        %665 = vmatpush2.msra.mxu0 0.0
        %666 = vmatprep.subr.mxu0 0.0
        %667 = vmatpush2.msra.mxu0 0.0
        %668 = vmatprep.subr.mxu0 0.0
        %669 = vmatpush2.msra.mxu0 0.0
        %670 = vmatprep.subr.mxu0 0.0
        %671 = vmatpush2.msra.mxu0 0.0
        %672 = vmatprep.subr.mxu0 0.0
        %673 = vmatpush2.msra.mxu0 0.0
        %674 = vmatprep.subr.mxu0 0.0
        %675 = vmatpush2.msra.mxu0 0.0
        %676 = vmatprep.subr.mxu0 0.0
        %677 = vmatpush2.msra.mxu0 0.0
        %678 = vmatprep.subr.mxu0 0.0
        %679 = vmatpush2.msra.mxu0 0.0
        %680 = vmatprep.subr.mxu0 0.0
        %681 = vmatpush2.msra.mxu0 0.0
        %682 = vmatprep.subr.mxu0 0.0
        %683 = vmatpush2.msra.mxu0 0.0
        %684 = vmatprep.subr.mxu0 0.0
        %685 = vmatpush2.msra.mxu0 0.0
        %686 = vmatprep.subr.mxu0 0.0
        %687 = vmatpush2.msra.mxu0 0.0
        %688 = vmatprep.mubr.f32.mxu0 0.0
        %689 = vmatmul.mubr.f32.gmra.mxu0 %v619
        %v690 = vpop.f32.mrf.mxu0
        %v691 = vadd.f32 0.0, %v690
        %v692 = vpop.f32.mrf.mxu0
        %693 = vmatprep.mubr.f32.mxu0 0.0
        %694 = vmatmul.mubr.f32.gmra.mxu0 %v622
        %v695 = vpop.f32.mrf.mxu0
        %v696 = vadd.f32 0.0, %v695
        %v697 = vpop.f32.mrf.mxu0
        %698 = vdwg.mxu0
        %v699 = vadd.f32 %v612, %v691
        %v700 = vadd.f32 %v613, %v696
        %v701 = vld [vmem:[%s264 + $0x5] sm:$0xff]
        %v702 = vld [vmem:[%s264 + $0xd] sm:$0xff]
        %s703 = scalar_lea.vmem %s1, 40
        %v704 = vld [vmem:[%s703] sm:$0xff]
        %v706 = vsel %vm277, %v701, 0
        %v709 = vsel %vm277, %v702, 0
        %711 = vmatprep.subr.mxu0 0.0
        %712 = vmatpush1.msra.mxu0 0.0
        %713 = vmatprep.subr.mxu0 0.0
        %714 = vmatpush1.msra.mxu0 0.0
        %715 = vmatprep.subr.mxu0 0.0
        %716 = vmatpush1.msra.mxu0 0.0
        %717 = vmatprep.subr.mxu0 0.0
        %718 = vmatpush1.msra.mxu0 0.0
        %719 = vmatprep.subr.mxu0 0.0
        %720 = vmatpush1.msra.mxu0 0.0
        %721 = vmatprep.subr.mxu0 0.0
        %722 = vmatpush1.msra.mxu0 0.0
        %723 = vmatprep.subr.mxu0 0.0
        %724 = vmatpush1.msra.mxu0 0.0
        %725 = vmatprep.subr.mxu0 0.0
        %726 = vmatpush1.msra.mxu0 0.0
        %727 = vmatprep.subr.mxu0 0.0
        %728 = vmatpush1.msra.mxu0 0.0
        %729 = vmatprep.subr.mxu0 0.0
        %730 = vmatpush1.msra.mxu0 0.0
        %731 = vmatprep.subr.mxu0 0.0
        %732 = vmatpush1.msra.mxu0 0.0
        %733 = vmatprep.subr.mxu0 0.0
        %734 = vmatpush1.msra.mxu0 0.0
        %735 = vmatprep.subr.mxu0 0.0
        %736 = vmatpush1.msra.mxu0 0.0
        %737 = vmatprep.subr.mxu0 0.0
        %738 = vmatpush1.msra.mxu0 0.0
        %739 = vmatprep.subr.mxu0 0.0
        %740 = vmatpush1.msra.mxu0 0.0
        %741 = vmatprep.subr.mxu0 0.0
        %742 = vmatpush1.msra.mxu0 %v704
        %743 = vmatprep.subr.mxu0 0.0
        %744 = vmatpush2.msra.mxu0 0.0
        %745 = vmatprep.subr.mxu0 0.0
        %746 = vmatpush2.msra.mxu0 0.0
        %747 = vmatprep.subr.mxu0 0.0
        %748 = vmatpush2.msra.mxu0 0.0
        %749 = vmatprep.subr.mxu0 0.0
        %750 = vmatpush2.msra.mxu0 0.0
        %751 = vmatprep.subr.mxu0 0.0
        %752 = vmatpush2.msra.mxu0 0.0
        %753 = vmatprep.subr.mxu0 0.0
        %754 = vmatpush2.msra.mxu0 0.0
        %755 = vmatprep.subr.mxu0 0.0
        %756 = vmatpush2.msra.mxu0 0.0
        %757 = vmatprep.subr.mxu0 0.0
        %758 = vmatpush2.msra.mxu0 0.0
        %759 = vmatprep.subr.mxu0 0.0
        %760 = vmatpush2.msra.mxu0 0.0
        %761 = vmatprep.subr.mxu0 0.0
        %762 = vmatpush2.msra.mxu0 0.0
        %763 = vmatprep.subr.mxu0 0.0
        %764 = vmatpush2.msra.mxu0 0.0
        %765 = vmatprep.subr.mxu0 0.0
        %766 = vmatpush2.msra.mxu0 0.0
        %767 = vmatprep.subr.mxu0 0.0
        %768 = vmatpush2.msra.mxu0 0.0
        %769 = vmatprep.subr.mxu0 0.0
        %770 = vmatpush2.msra.mxu0 0.0
        %771 = vmatprep.subr.mxu0 0.0
        %772 = vmatpush2.msra.mxu0 0.0
        %773 = vmatprep.subr.mxu0 0.0
        %774 = vmatpush2.msra.mxu0 0.0
        %775 = vmatprep.mubr.f32.mxu0 0.0
        %776 = vmatmul.mubr.f32.gmra.mxu0 %v706
        %v777 = vpop.f32.mrf.mxu0
        %v778 = vadd.f32 0.0, %v777
        %v779 = vpop.f32.mrf.mxu0
        %780 = vmatprep.mubr.f32.mxu0 0.0
        %781 = vmatmul.mubr.f32.gmra.mxu0 %v709
        %v782 = vpop.f32.mrf.mxu0
        %v783 = vadd.f32 0.0, %v782
        %v784 = vpop.f32.mrf.mxu0
        %785 = vdwg.mxu0
        %v786 = vadd.f32 %v699, %v778
        %v787 = vadd.f32 %v700, %v783
        %v788 = vld [vmem:[%s264 + $0x6] sm:$0xff]
        %v789 = vld [vmem:[%s264 + $0xe] sm:$0xff]
        %s790 = scalar_lea.vmem %s1, 48
        %v791 = vld [vmem:[%s790] sm:$0xff]
        %v793 = vsel %vm277, %v788, 0
        %v796 = vsel %vm277, %v789, 0
        %798 = vmatprep.subr.mxu0 0.0
        %799 = vmatpush1.msra.mxu0 0.0
        %800 = vmatprep.subr.mxu0 0.0
        %801 = vmatpush1.msra.mxu0 0.0
        %802 = vmatprep.subr.mxu0 0.0
        %803 = vmatpush1.msra.mxu0 0.0
        %804 = vmatprep.subr.mxu0 0.0
        %805 = vmatpush1.msra.mxu0 0.0
        %806 = vmatprep.subr.mxu0 0.0
        %807 = vmatpush1.msra.mxu0 0.0
        %808 = vmatprep.subr.mxu0 0.0
        %809 = vmatpush1.msra.mxu0 0.0
        %810 = vmatprep.subr.mxu0 0.0
        %811 = vmatpush1.msra.mxu0 0.0
        %812 = vmatprep.subr.mxu0 0.0
        %813 = vmatpush1.msra.mxu0 0.0
        %814 = vmatprep.subr.mxu0 0.0
        %815 = vmatpush1.msra.mxu0 0.0
        %816 = vmatprep.subr.mxu0 0.0
        %817 = vmatpush1.msra.mxu0 0.0
        %818 = vmatprep.subr.mxu0 0.0
        %819 = vmatpush1.msra.mxu0 0.0
        %820 = vmatprep.subr.mxu0 0.0
        %821 = vmatpush1.msra.mxu0 0.0
        %822 = vmatprep.subr.mxu0 0.0
        %823 = vmatpush1.msra.mxu0 0.0
        %824 = vmatprep.subr.mxu0 0.0
        %825 = vmatpush1.msra.mxu0 0.0
        %826 = vmatprep.subr.mxu0 0.0
        %827 = vmatpush1.msra.mxu0 0.0
        %828 = vmatprep.subr.mxu0 0.0
        %829 = vmatpush1.msra.mxu0 %v791
        %830 = vmatprep.subr.mxu0 0.0
        %831 = vmatpush2.msra.mxu0 0.0
        %832 = vmatprep.subr.mxu0 0.0
        %833 = vmatpush2.msra.mxu0 0.0
        %834 = vmatprep.subr.mxu0 0.0
        %835 = vmatpush2.msra.mxu0 0.0
        %836 = vmatprep.subr.mxu0 0.0
        %837 = vmatpush2.msra.mxu0 0.0
        %838 = vmatprep.subr.mxu0 0.0
        %839 = vmatpush2.msra.mxu0 0.0
        %840 = vmatprep.subr.mxu0 0.0
        %841 = vmatpush2.msra.mxu0 0.0
        %842 = vmatprep.subr.mxu0 0.0
        %843 = vmatpush2.msra.mxu0 0.0
        %844 = vmatprep.subr.mxu0 0.0
        %845 = vmatpush2.msra.mxu0 0.0
        %846 = vmatprep.subr.mxu0 0.0
        %847 = vmatpush2.msra.mxu0 0.0
        %848 = vmatprep.subr.mxu0 0.0
        %849 = vmatpush2.msra.mxu0 0.0
        %850 = vmatprep.subr.mxu0 0.0
        %851 = vmatpush2.msra.mxu0 0.0
        %852 = vmatprep.subr.mxu0 0.0
        %853 = vmatpush2.msra.mxu0 0.0
        %854 = vmatprep.subr.mxu0 0.0
        %855 = vmatpush2.msra.mxu0 0.0
        %856 = vmatprep.subr.mxu0 0.0
        %857 = vmatpush2.msra.mxu0 0.0
        %858 = vmatprep.subr.mxu0 0.0
        %859 = vmatpush2.msra.mxu0 0.0
        %860 = vmatprep.subr.mxu0 0.0
        %861 = vmatpush2.msra.mxu0 0.0
        %862 = vmatprep.mubr.f32.mxu0 0.0
        %863 = vmatmul.mubr.f32.gmra.mxu0 %v793
        %v864 = vpop.f32.mrf.mxu0
        %v865 = vadd.f32 0.0, %v864
        %v866 = vpop.f32.mrf.mxu0
        %867 = vmatprep.mubr.f32.mxu0 0.0
        %868 = vmatmul.mubr.f32.gmra.mxu0 %v796
        %v869 = vpop.f32.mrf.mxu0
        %v870 = vadd.f32 0.0, %v869
        %v871 = vpop.f32.mrf.mxu0
        %872 = vdwg.mxu0
        %v873 = vadd.f32 %v786, %v865
        %v874 = vadd.f32 %v787, %v870
        %v875 = vld [vmem:[%s264 + $0x7] sm:$0xff]
        %v876 = vld [vmem:[%s264 + $0xf] sm:$0xff]
        %s877 = scalar_lea.vmem %s1, 56
        %v878 = vld [vmem:[%s877] sm:$0xff]
        %v880 = vsel %vm277, %v875, 0
        %v883 = vsel %vm277, %v876, 0
        %885 = vmatprep.subr.mxu0 0.0
        %886 = vmatpush1.msra.mxu0 0.0
        %887 = vmatprep.subr.mxu0 0.0
        %888 = vmatpush1.msra.mxu0 0.0
        %889 = vmatprep.subr.mxu0 0.0
        %890 = vmatpush1.msra.mxu0 0.0
        %891 = vmatprep.subr.mxu0 0.0
        %892 = vmatpush1.msra.mxu0 0.0
        %893 = vmatprep.subr.mxu0 0.0
        %894 = vmatpush1.msra.mxu0 0.0
        %895 = vmatprep.subr.mxu0 0.0
        %896 = vmatpush1.msra.mxu0 0.0
        %897 = vmatprep.subr.mxu0 0.0
        %898 = vmatpush1.msra.mxu0 0.0
        %899 = vmatprep.subr.mxu0 0.0
        %900 = vmatpush1.msra.mxu0 0.0
        %901 = vmatprep.subr.mxu0 0.0
        %902 = vmatpush1.msra.mxu0 0.0
        %903 = vmatprep.subr.mxu0 0.0
        %904 = vmatpush1.msra.mxu0 0.0
        %905 = vmatprep.subr.mxu0 0.0
        %906 = vmatpush1.msra.mxu0 0.0
        %907 = vmatprep.subr.mxu0 0.0
        %908 = vmatpush1.msra.mxu0 0.0
        %909 = vmatprep.subr.mxu0 0.0
        %910 = vmatpush1.msra.mxu0 0.0
        %911 = vmatprep.subr.mxu0 0.0
        %912 = vmatpush1.msra.mxu0 0.0
        %913 = vmatprep.subr.mxu0 0.0
        %914 = vmatpush1.msra.mxu0 0.0
        %915 = vmatprep.subr.mxu0 0.0
        %916 = vmatpush1.msra.mxu0 %v878
        %917 = vmatprep.subr.mxu0 0.0
        %918 = vmatpush2.msra.mxu0 0.0
        %919 = vmatprep.subr.mxu0 0.0
        %920 = vmatpush2.msra.mxu0 0.0
        %921 = vmatprep.subr.mxu0 0.0
        %922 = vmatpush2.msra.mxu0 0.0
        %923 = vmatprep.subr.mxu0 0.0
        %924 = vmatpush2.msra.mxu0 0.0
        %925 = vmatprep.subr.mxu0 0.0
        %926 = vmatpush2.msra.mxu0 0.0
        %927 = vmatprep.subr.mxu0 0.0
        %928 = vmatpush2.msra.mxu0 0.0
        %929 = vmatprep.subr.mxu0 0.0
        %930 = vmatpush2.msra.mxu0 0.0
        %931 = vmatprep.subr.mxu0 0.0
        %932 = vmatpush2.msra.mxu0 0.0
        %933 = vmatprep.subr.mxu0 0.0
        %934 = vmatpush2.msra.mxu0 0.0
        %935 = vmatprep.subr.mxu0 0.0
        %936 = vmatpush2.msra.mxu0 0.0
        %937 = vmatprep.subr.mxu0 0.0
        %938 = vmatpush2.msra.mxu0 0.0
        %939 = vmatprep.subr.mxu0 0.0
        %940 = vmatpush2.msra.mxu0 0.0
        %941 = vmatprep.subr.mxu0 0.0
        %942 = vmatpush2.msra.mxu0 0.0
        %943 = vmatprep.subr.mxu0 0.0
        %944 = vmatpush2.msra.mxu0 0.0
        %945 = vmatprep.subr.mxu0 0.0
        %946 = vmatpush2.msra.mxu0 0.0
        %947 = vmatprep.subr.mxu0 0.0
        %948 = vmatpush2.msra.mxu0 0.0
        %949 = vmatprep.mubr.f32.mxu0 0.0
        %950 = vmatmul.mubr.f32.gmra.mxu0 %v880
        %v951 = vpop.f32.mrf.mxu0
        %v952 = vadd.f32 0.0, %v951
        %v953 = vpop.f32.mrf.mxu0
        %954 = vmatprep.mubr.f32.mxu0 0.0
        %955 = vmatmul.mubr.f32.gmra.mxu0 %v883
        %v956 = vpop.f32.mrf.mxu0
        %v957 = vadd.f32 0.0, %v956
        %v958 = vpop.f32.mrf.mxu0
        %959 = vdwg.mxu0
        %v960 = vadd.f32 %v873, %v952
        %v961 = vadd.f32 %v874, %v957
        %v962 = vld [vmem:[%s264 + $0x8] sm:$0xff]
        %v963 = vld [vmem:[%s264 + $0x10] sm:$0xff]
        %s964 = scalar_lea.vmem %s1, 64
        %v965 = vld [vmem:[%s964] sm:$0xff]
        %v967 = vsel %vm277, %v962, 0
        %v970 = vsel %vm277, %v963, 0
        %972 = vmatprep.subr.mxu0 0.0
        %973 = vmatpush1.msra.mxu0 0.0
        %974 = vmatprep.subr.mxu0 0.0
        %975 = vmatpush1.msra.mxu0 0.0
        %976 = vmatprep.subr.mxu0 0.0
        %977 = vmatpush1.msra.mxu0 0.0
        %978 = vmatprep.subr.mxu0 0.0
        %979 = vmatpush1.msra.mxu0 0.0
        %980 = vmatprep.subr.mxu0 0.0
        %981 = vmatpush1.msra.mxu0 0.0
        %982 = vmatprep.subr.mxu0 0.0
        %983 = vmatpush1.msra.mxu0 0.0
        %984 = vmatprep.subr.mxu0 0.0
        %985 = vmatpush1.msra.mxu0 0.0
        %986 = vmatprep.subr.mxu0 0.0
        %987 = vmatpush1.msra.mxu0 0.0
        %988 = vmatprep.subr.mxu0 0.0
        %989 = vmatpush1.msra.mxu0 0.0
        %990 = vmatprep.subr.mxu0 0.0
        %991 = vmatpush1.msra.mxu0 0.0
        %992 = vmatprep.subr.mxu0 0.0
        %993 = vmatpush1.msra.mxu0 0.0
        %994 = vmatprep.subr.mxu0 0.0
        %995 = vmatpush1.msra.mxu0 0.0
        %996 = vmatprep.subr.mxu0 0.0
        %997 = vmatpush1.msra.mxu0 0.0
        %998 = vmatprep.subr.mxu0 0.0
        %999 = vmatpush1.msra.mxu0 0.0
        %1000 = vmatprep.subr.mxu0 0.0
        %1001 = vmatpush1.msra.mxu0 0.0
        %1002 = vmatprep.subr.mxu0 0.0
        %1003 = vmatpush1.msra.mxu0 %v965
        %1004 = vmatprep.subr.mxu0 0.0
        %1005 = vmatpush2.msra.mxu0 0.0
        %1006 = vmatprep.subr.mxu0 0.0
        %1007 = vmatpush2.msra.mxu0 0.0
        %1008 = vmatprep.subr.mxu0 0.0
        %1009 = vmatpush2.msra.mxu0 0.0
        %1010 = vmatprep.subr.mxu0 0.0
        %1011 = vmatpush2.msra.mxu0 0.0
        %1012 = vmatprep.subr.mxu0 0.0
        %1013 = vmatpush2.msra.mxu0 0.0
        %1014 = vmatprep.subr.mxu0 0.0
        %1015 = vmatpush2.msra.mxu0 0.0
        %1016 = vmatprep.subr.mxu0 0.0
        %1017 = vmatpush2.msra.mxu0 0.0
        %1018 = vmatprep.subr.mxu0 0.0
        %1019 = vmatpush2.msra.mxu0 0.0
        %1020 = vmatprep.subr.mxu0 0.0
        %1021 = vmatpush2.msra.mxu0 0.0
        %1022 = vmatprep.subr.mxu0 0.0
        %1023 = vmatpush2.msra.mxu0 0.0
        %1024 = vmatprep.subr.mxu0 0.0
        %1025 = vmatpush2.msra.mxu0 0.0
        %1026 = vmatprep.subr.mxu0 0.0
        %1027 = vmatpush2.msra.mxu0 0.0
        %1028 = vmatprep.subr.mxu0 0.0
        %1029 = vmatpush2.msra.mxu0 0.0
        %1030 = vmatprep.subr.mxu0 0.0
        %1031 = vmatpush2.msra.mxu0 0.0
        %1032 = vmatprep.subr.mxu0 0.0
        %1033 = vmatpush2.msra.mxu0 0.0
        %1034 = vmatprep.subr.mxu0 0.0
        %1035 = vmatpush2.msra.mxu0 0.0
        %1036 = vmatprep.mubr.f32.mxu0 0.0
        %1037 = vmatmul.mubr.f32.gmra.mxu0 %v967
        %v1038 = vpop.f32.mrf.mxu0
        %v1039 = vadd.f32 0.0, %v1038
        %v1040 = vpop.f32.mrf.mxu0
        %1041 = vmatprep.mubr.f32.mxu0 0.0
        %1042 = vmatmul.mubr.f32.gmra.mxu0 %v970
        %v1043 = vpop.f32.mrf.mxu0
        %v1044 = vadd.f32 0.0, %v1043
        %v1045 = vpop.f32.mrf.mxu0
        %1046 = vdwg.mxu0
        %v1047 = vadd.f32 %v960, %v1039
        %v1048 = vadd.f32 %v961, %v1044
        %v1049 = vld [vmem:[%s2] sm:$0x1]
        %v1051 = vlaneseq
        %v1052 = vshrl.u32 %v1051, 7
        %v1053 = vsub.s32 0, %v1052
        %v1054 = vrot.slane %v1049, %v1053
        %v1056 = vadd.f32 %v1047, %v1054
        %v1057 = vadd.f32 %v1048, %v1054
        %v1058 = vmax.f32 %v1056, 0.0
        %v1059 = vmax.f32 %v1057, 0.0
        %vm1060 = vcmask 261120
        %v1061 = vsel %vm1060, %v1058, 0.0
        %1062 = vadd.xlane.f32.xlu0 %v1061
        %v1063 = vpop.xlane.xlu0 %1062
        %v1064 = vsel %vm1060, %v1059, 0.0
        %1065 = vadd.xlane.f32.xlu0 %v1064
        %v1066 = vpop.xlane.xlu0 %1065
        %v1067 = vrcp.pop 32.0
        %v1068 = vmul.f32 %v1063, %v1067
        %v1069 = vmul.f32 %v1066, %v1067
        %v1070 = vsub.f32 %v1058, %v1068
        %v1071 = vsub.f32 %v1059, %v1069
        %v1072 = vmul.f32 %v1070, %v1070
        %v1073 = vmul.f32 %v1071, %v1071
        %v1074 = vsel %vm1060, %v1072, 0.0
        %1075 = vadd.xlane.f32.xlu0 %v1074
        %v1076 = vpop.xlane.xlu0 %1075
        %v1077 = vsel %vm1060, %v1073, 0.0
        %1078 = vadd.xlane.f32.xlu0 %v1077
        %v1079 = vpop.xlane.xlu0 %1078
        %v1080 = vmul.f32 %v1076, %v1067
        %v1081 = vmul.f32 %v1079, %v1067
        %v1082 = vadd.f32 %v1080, 1e-05
        %v1083 = vadd.f32 %v1081, 1e-05
        %v1084 = vrsqrt.pop %v1082
        %v1085 = vrsqrt.pop %v1083
        %v1086 = vmul.f32 %v1070, %v1084
        %v1087 = vmul.f32 %v1071, %v1085
        %v1088 = vld [vmem:[%s3] sm:$0x1]
        %v1090 = vlaneseq
        %v1091 = vshrl.u32 %v1090, 7
        %v1092 = vsub.s32 0, %v1091
        %v1093 = vrot.slane %v1088, %v1092
        %v1095 = vmul.f32 %v1086, %v1093
        %v1096 = vmul.f32 %v1087, %v1093
        %v1097 = vld [vmem:[%s4] sm:$0x1]
        %v1099 = vlaneseq
        %v1100 = vshrl.u32 %v1099, 7
        %v1101 = vsub.s32 0, %v1100
        %v1102 = vrot.slane %v1097, %v1101
        %v1104 = vadd.f32 %v1095, %v1102
        %v1105 = vadd.f32 %v1096, %v1102
        %v1106 = vld [vmem:[%s269] sm:$0xff]
        %v1107 = vld [vmem:[%s269 + $0x8] sm:$0xff]
        %1109 = vset.pattern.permute.xlu0 0
        %1110 = vperm.xlu0 %1109, %v1106
        %v1111 = vpop.permute.xlu0 %1110
        %1114 = vset.pattern.permute.xlu0 0
        %1115 = vperm.xlu0 %1114, %v1107
        %v1116 = vpop.permute.xlu0 %1115
        %v1118 = vmul.f32 %v1104, %v1111
        %v1119 = vmul.f32 %v1105, %v1116
        %1120 = vst.msk [vmem:[%s259] sm:$0xff] %vm1060, %v1118
        %1121 = vst.msk [vmem:[%s259 + $0x8] sm:$0xff] %vm1060, %v1119
        %s1122 = sand.u32 %s164, 1
        %s1123 = scalar_lea.sflag [#allocation3], %s1122
        %s1124 = sand.u32 %s164, 1
        %s1125 = smul.addr %s1124, 16
        %s1126 = scalar_lea.vmem [#allocation2], %s1125
        // Predicated region
        $region45: #{tpu_custom_call.1} parent=43 // pred_check
          %p1127 = pneg %p174
        $region46: #{tpu_custom_call.1} parent=43 // pred_check_branch
          %1129 = sbr.rel (%p1127) target = $region48
        $region47: #{tpu_custom_call.1} parent=43 // pred_region
          %s1131 = ssub.s32 256, 256
          %1132 = vsyncadd %s1123, %s1131
          %s1133 = smul.addr %s20, 2
          %s1134 = smul.addr %s1133, 128
          %s1135 = scalar_lea.hbm %s6, %s1134
          %s1136 = sshll.u32 %s1126, 4
          %s1137 = int_to_ptr.vmem [resolvable:$true] %s1136
          %1142 = dma.vmem_to_hbm [thread:$0]  %s1137, 256, %s1135, %s1123, 128, 128, 8
        $region48: #{tpu_custom_call.1} parent=43 // pred_fallthru
          _
      $region44: #{tpu_custom_call.1} parent=5 // pred_fallthru
        _
      %p1143 = scmp.le.s32.totalorder 2, %s15
      // Predicated region
      $region49: #{tpu_custom_call.1} parent=5 // pred_check
        %p1144 = pneg %p1143
      $region50: #{tpu_custom_call.1} parent=5 // pred_check_branch
        %1146 = sbr.rel (%p1144) target = $region52
      $region51: #{tpu_custom_call.1} parent=5 // pred_region
        %s1147 = ssub.s32 %s15, 2
        // Predicated region
        $region53: #{tpu_custom_call.1} parent=51 // pred_check
          %p1148 = pneg %p180
        $region54: #{tpu_custom_call.1} parent=51 // pred_check_branch
          %1150 = sbr.rel (%p1148) target = $region56
        $region55: #{tpu_custom_call.1} parent=51 // pred_region
          %s1151 = sand.u32 %s165, 1
          %s1152 = scalar_lea.sflag [#allocation3], %s1151
          %s1153 = sand.u32 %s165, 1
          %s1154 = smul.addr %s1153, 16
          %s1155 = scalar_lea.vmem [#allocation2], %s1154
          %1156 = dma.done %s1152, 256
        $region56: #{tpu_custom_call.1} parent=51 // pred_fallthru
          _
      $region52: #{tpu_custom_call.1} parent=5 // pred_fallthru
        _
    $region6: #{tpu_custom_call.1} parent=1 // loop_footer
      %s19 = sadd.s32 1, %s15
    $region7: #{tpu_custom_call.1} parent=1 // loop_footer_branch
      %14 = sbr.rel target = $region3
    $region8: #{tpu_custom_call.1} parent=1 // loop_exit
      _
    %1157 = vsyncpa [#allocation3], 1
    %s1158 = scalar_lea.sflag [#allocation3], 1
    %1159 = vsyncpa %s1158, 1

</llo_original>
